<compile_context>
chip_gen: v7x
topology: tpu7x:2x2x1
jax: 0.10.0
libtpu: 0.0.40
codegen_flags: <defaults>
</compile_context>

<pallas_src>
import functools
import math

import jax
import jax.numpy as jnp
from jax.experimental import pallas as pl
from jax.experimental.pallas import tpu as pltpu


# ----------------------------------------------------------------------------- kernel
def _simnorm_kernel(x_ref, g_ref, o_ref):
    """Grouped softmax on a (tile_rows, H) block.

    Groups are contiguous runs of `simnorm_dim` lanes; g_ref is the (H, H)
    block-diagonal ones matrix (1 where both lanes belong to the same group).
    """
    x = x_ref[...].astype(jnp.float32)
    # Per-row max is the same constant for every group in that row, so subtracting it
    # leaves each group's softmax unchanged while preventing exp overflow.
    m = jnp.max(x, axis=-1, keepdims=True)                    # XLU lane reduce
    e = jnp.exp(x - m)                                        # EUP
    # Segmented (per-group) sums, broadcast back to every lane of the group, via one
    # MXU matmul with the block-diagonal ones matrix (MXU is otherwise idle here).
    s = jnp.dot(e, g_ref[...], preferred_element_type=jnp.float32)
    o_ref[...] = (e / s).astype(o_ref.dtype)                  # exact division (no approx)


# ----------------------------------------------------------------------------- wrapper
def _round_up(n, m):
    return ((n + m - 1) // m) * m


def _choose_tile_rows(rows, h, itemsize, target_block_bytes):
    """Pick a row tile: ~target_block_bytes per block, multiple of 8, >=2 grid steps."""
    if rows <= 8:
        return rows                                   # block == full array rows
    t = max(8, (target_block_bytes // (h * itemsize)) // 8 * 8)
    # keep at least 2 grid steps so v7x's two TensorCores both get work
    half = _round_up((rows + 1) // 2, 8)
    return min(t, half)


@functools.partial(jax.jit, static_argnames=("simnorm_dim", "target_block_bytes"))
def simnorm(x, *, simnorm_dim, target_block_bytes=2 << 20):
    """SimNorm forward: softmax over contiguous groups of `simnorm_dim` in the last dim."""
    shp = x.shape
    if len(shp) > 1 and shp[1] == 0:                  # matches the PyTorch early-out
        return x
    if x.size == 0:                                   # avoid a zero-sized grid
        return x

    v = simnorm_dim
    h = shp[-1]
    if h % v != 0:
        raise ValueError(f"last dim {h} not divisible by simnorm_dim {v}")

    rows = math.prod(shp[:-1])
    x2 = x.reshape(rows, h)                           # free: row-major reshape, no copy

    tile_r = _choose_tile_rows(rows, h, x.dtype.itemsize, target_block_bytes)
    grid = (pl.cdiv(rows, tile_r),)

    # Block-diagonal group mask (constant under jit; tiny vs. the data tensor).
    gid = jnp.arange(h, dtype=jnp.int32) // v
    g = (gid[:, None] == gid[None, :]).astype(jnp.float32)

    out = pl.pallas_call(
        _simnorm_kernel,
        grid=grid,
        in_specs=[
            pl.BlockSpec((tile_r, h), lambda i: (i, 0)),   # data tile (lane-dense on H)
            pl.BlockSpec((h, h), lambda i: (0, 0)),        # group mask, same block each step
        ],
        out_specs=pl.BlockSpec((tile_r, h), lambda i: (i, 0)),
        out_shape=jax.ShapeDtypeStruct((rows, h), x.dtype),
        compiler_params=pltpu.CompilerParams(dimension_semantics=("parallel",)),
    )(x2, g)

    return out.reshape(shp)


# ----------------------------------------------------------------------------- reference
def simnorm_ref(x, simnorm_dim):
    shp = x.shape
    if len(shp) > 1 and shp[1] == 0:
        return x
    xr = x.reshape(shp[:-1] + (-1, simnorm_dim))
    return jax.nn.softmax(xr, axis=-1).reshape(shp)


# ----------------------------------------------------------------------------- main
if __name__ == "__main__":
    key = jax.random.PRNGKey(0)
    k1, k2 = jax.random.split(key)
    dim = 8

    # Canonical small SimNorm input: (batch=2, hidden=32), simnorm_dim=8.
    x1 = jax.random.normal(k1, (2, 32), jnp.float32) * 3.0
    y1 = jax.block_until_ready(simnorm(x1, simnorm_dim=dim))
    r1 = simnorm_ref(x1, dim)
    assert y1.shape == x1.shape, (y1.shape, x1.shape)
    assert bool(jnp.all(jnp.isfinite(y1)))
    assert float(jnp.max(jnp.abs(y1 - r1))) < 3e-3, float(jnp.max(jnp.abs(y1 - r1)))
    # each group of `dim` must sum to ~1
    assert float(jnp.max(jnp.abs(y1.reshape(-1, dim).sum(-1) - 1.0))) < 3e-3

    # Higher-rank input exercising the multi-tile parallel grid and a ragged last block.
    x2 = jax.random.normal(k2, (3, 6, 200), jnp.float32) * 5.0
    y2 = jax.block_until_ready(simnorm(x2, simnorm_dim=dim))
    r2 = simnorm_ref(x2, dim)
    assert y2.shape == x2.shape, (y2.shape, x2.shape)
    assert bool(jnp.all(jnp.isfinite(y2)))
    assert float(jnp.max(jnp.abs(y2 - r2))) < 3e-3, float(jnp.max(jnp.abs(y2 - r2)))
    assert float(jnp.max(jnp.abs(y2.reshape(-1, dim).sum(-1) - 1.0))) < 3e-3

    print("KERNEL_OK")
</pallas_src>

<mosaic_0001>
module attributes {stable_mosaic.version = 11 : i64} {
  func.func @_simnorm_kernel(%arg0: i32, %arg1: memref<2x32xf32, #tpu.memory_space<vmem>>, %arg2: memref<32x32xf32, #tpu.memory_space<vmem>>, %arg3: memref<2x32xf32, #tpu.memory_space<vmem>>) attributes {dimension_semantics = [#tpu.dimension_semantics<parallel>], iteration_bounds = array<i64: 1>, scalar_prefetch = 0 : i64, scratch_operands = 0 : i64, tpu.core_type = #tpu.core_type<tc>, window_params = [{transform_indices = @transform_0, window_bounds = array<i64: 2, 32>}, {pipeline_mode = #tpu.pipeline_mode<synchronous>, transform_indices = @transform_1, window_bounds = array<i64: 32, 32>}, {transform_indices = @transform_2, window_bounds = array<i64: 2, 32>}]} {
    %c0 = arith.constant 0 : index
    %c0_0 = arith.constant 0 : index
    %0 = vector.load %arg1[%c0, %c0_0] : memref<2x32xf32, #tpu.memory_space<vmem>>, vector<2x32xf32>
    %cst = arith.constant dense<0xFF800000> : vector<2xf32>
    %1 = vector.multi_reduction <maximumf>, %0, %cst [1] : vector<2x32xf32> to vector<2xf32>
    %2 = vector.shape_cast %1 : vector<2xf32> to vector<2x1xf32>
    %3 = vector.broadcast %2 : vector<2x1xf32> to vector<2x32xf32>
    %4 = arith.subf %0, %3 : vector<2x32xf32>
    %5 = math.exp %4 : vector<2x32xf32>
    %c0_1 = arith.constant 0 : index
    %c0_2 = arith.constant 0 : index
    %6 = vector.load %arg2[%c0_1, %c0_2] : memref<32x32xf32, #tpu.memory_space<vmem>>, vector<32x32xf32>
    %cst_3 = arith.constant dense<0.000000e+00> : vector<2x32xf32>
    %7 = tpu.matmul %5, %6, %cst_3 {dimension_numbers = #tpu.dot_dimension_numbers<[1], [0], [0], [1], [0, 0, 1, 1], [], []>} : vector<2x32xf32>, vector<32x32xf32>, vector<2x32xf32> -> vector<2x32xf32>
    %8 = arith.divf %5, %7 : vector<2x32xf32>
    %c0_4 = arith.constant 0 : index
    %c0_5 = arith.constant 0 : index
    %9 = vector.load %arg3[%c0_4, %c0_5] : memref<2x32xf32, #tpu.memory_space<vmem>>, vector<2x32xf32>
    tpu.vector_store %arg3[%c0_4, %c0_5], %8 {strides = array<i32>} : memref<2x32xf32, #tpu.memory_space<vmem>>, vector<2x32xf32>,
    return
  }
  func.func @transform_0(%arg0: i32) -> (i32, i32) {
    %c0_i32 = arith.constant 0 : i32
    %c0_i32_0 = arith.constant 0 : i32
    return %arg0, %c0_i32 : i32, i32
  }
  func.func @transform_1(%arg0: i32) -> (i32, i32) {
    %c0_i32 = arith.constant 0 : i32
    %c0_i32_0 = arith.constant 0 : i32
    %c0_i32_1 = arith.constant 0 : i32
    return %c0_i32, %c0_i32_0 : i32, i32
  }
  func.func @transform_2(%arg0: i32) -> (i32, i32) {
    %c0_i32 = arith.constant 0 : i32
    %c0_i32_0 = arith.constant 0 : i32
    return %arg0, %c0_i32 : i32, i32
  }
}

</mosaic_0001>

<llo_original>
// kernel: simnorm.1
$region0: #{simnorm.1}
  #allocation0 [shape = 'u32[]', space=smem, size = 0x4, offset = 0x4, fixed_abs, tag = 'smem constant byte address 0x4 - core index']
  #allocation1 [shape = 'u32[144,128]{1,0:T(1,128)}', space=vmem, size = 0x12000, scoped, tag = 'internal scratch']
  %s0 = inlined_call_operand.vmem [shape: f32[2,32], index: 0, kind: input, shape index: {}]
  %s1 = inlined_call_operand.vmem [shape: f32[32,32], index: 1, kind: input, shape index: {}]
  %s2 = inlined_call_operand.hbm [shape: f32[2,32], index: 2, kind: output, shape index: {}]
  %s3 = sld [smem:[#allocation0]]
  $region18: #{simnorm.1} parent=0
    _
  %s5 = ssub.s32 1, %s3
  %s6 = scalar_select 0, %s5, %s3
  $region1: #{simnorm.1} parent=0
    #allocation2 [shape = 'u8[1024]{0}', space=vmem, size = 0x400, scoped, tag = 'output window, operand 0, single buffered']
    #allocation3 [shape = 's32[1]{0}', space=sflag, size = 0x4, scoped, tag = 'scoped memory for simnorm.1']
    %7 = vsyncpa [#allocation3], 0
    // Predicated region
    $region2: #{simnorm.1} parent=1 // pred_check
      _
    $region3: #{simnorm.1} parent=1 // pred_check_branch
      %9 = sbr.rel (0) target = $region5
    $region4: #{simnorm.1} parent=1 // pred_region
      _
    $region5: #{simnorm.1} parent=1 // pred_fallthru
      _
    // Predicated region
    $region6: #{simnorm.1} parent=1 // pred_check
      _
    $region7: #{simnorm.1} parent=1 // pred_check_branch
      %11 = sbr.rel (0) target = $region9
    $region8: #{simnorm.1} parent=1 // pred_region
      _
    $region9: #{simnorm.1} parent=1 // pred_fallthru
      _
    %v12 = vld [vmem:[%s0] sm:$0x3]
    %vm13 = vcmask 254976
    %v14 = vsel %vm13, %v12, -inf
    %15 = vmax.xlane.f32.xlu0 %v14
    %v16 = vpop.xlane.xlu0 %15
    %v17 = vsub.f32 %v12, %v16
    %v18 = vmul.f32 %v17, 1.442695
    %v19 = vpow.pop %v18
    %v20 = vld [vmem:[%s1] sm:$0xff]
    %v21 = vld [vmem:[%s1 + $0x8] sm:$0xff]
    %v22 = vld [vmem:[%s1 + $0x10] sm:$0xff]
    %v23 = vld [vmem:[%s1 + $0x18] sm:$0xff]
    %vm24 = vcmask 261120
    %v26 = vsel %vm24, %v19, 0
    %28 = vmatprep.subr.mxu0 0.0
    %29 = vmatpush1.msra.mxu0 %v20
    %30 = vmatprep.subr.mxu0 0.0
    %31 = vmatpush1.msra.mxu0 %v21
    %32 = vmatprep.subr.mxu0 0.0
    %33 = vmatpush1.msra.mxu0 %v22
    %34 = vmatprep.subr.mxu0 0.0
    %35 = vmatpush1.msra.mxu0 %v23
    %36 = vmatprep.subr.mxu0 0.0
    %37 = vmatpush1.msra.mxu0 0.0
    %38 = vmatprep.subr.mxu0 0.0
    %39 = vmatpush1.msra.mxu0 0.0
    %40 = vmatprep.subr.mxu0 0.0
    %41 = vmatpush1.msra.mxu0 0.0
    %42 = vmatprep.subr.mxu0 0.0
    %43 = vmatpush1.msra.mxu0 0.0
    %44 = vmatprep.subr.mxu0 0.0
    %45 = vmatpush1.msra.mxu0 0.0
    %46 = vmatprep.subr.mxu0 0.0
    %47 = vmatpush1.msra.mxu0 0.0
    %48 = vmatprep.subr.mxu0 0.0
    %49 = vmatpush1.msra.mxu0 0.0
    %50 = vmatprep.subr.mxu0 0.0
    %51 = vmatpush1.msra.mxu0 0.0
    %52 = vmatprep.subr.mxu0 0.0
    %53 = vmatpush1.msra.mxu0 0.0
    %54 = vmatprep.subr.mxu0 0.0
    %55 = vmatpush1.msra.mxu0 0.0
    %56 = vmatprep.subr.mxu0 0.0
    %57 = vmatpush1.msra.mxu0 0.0
    %58 = vmatprep.subr.mxu0 0.0
    %59 = vmatpush1.msra.mxu0 0.0
    %60 = vmatprep.subr.mxu0 0.0
    %61 = vmatpush1.msra.mxu0 0.0
    %62 = vmatprep.subr.mxu0 0.0
    %63 = vmatpush1.msra.mxu0 0.0
    %64 = vmatprep.subr.mxu0 0.0
    %65 = vmatpush1.msra.mxu0 0.0
    %66 = vmatprep.subr.mxu0 0.0
    %67 = vmatpush1.msra.mxu0 0.0
    %68 = vmatprep.subr.mxu0 0.0
    %69 = vmatpush1.msra.mxu0 0.0
    %70 = vmatprep.subr.mxu0 0.0
    %71 = vmatpush1.msra.mxu0 0.0
    %72 = vmatprep.subr.mxu0 0.0
    %73 = vmatpush1.msra.mxu0 0.0
    %74 = vmatprep.subr.mxu0 0.0
    %75 = vmatpush1.msra.mxu0 0.0
    %76 = vmatprep.subr.mxu0 0.0
    %77 = vmatpush1.msra.mxu0 0.0
    %78 = vmatprep.subr.mxu0 0.0
    %79 = vmatpush1.msra.mxu0 0.0
    %80 = vmatprep.subr.mxu0 0.0
    %81 = vmatpush1.msra.mxu0 0.0
    %82 = vmatprep.subr.mxu0 0.0
    %83 = vmatpush1.msra.mxu0 0.0
    %84 = vmatprep.subr.mxu0 0.0
    %85 = vmatpush1.msra.mxu0 0.0
    %86 = vmatprep.subr.mxu0 0.0
    %87 = vmatpush1.msra.mxu0 0.0
    %88 = vmatprep.subr.mxu0 0.0
    %89 = vmatpush1.msra.mxu0 0.0
    %90 = vmatprep.subr.mxu0 0.0
    %91 = vmatpush1.msra.mxu0 0.0
    %92 = vmatprep.mubr.f32.mxu0 0.0
    %93 = vmatmul.mubr.f32.gmra.mrb[0].mxu0 %v26
    %v94 = vpop.f32.mrb[0].mxu0
    %v95 = vadd.f32 0.0, %v94
    %v96 = vpop.f32.mrb[0].mxu0
    %97 = vdwg.mxu0
    %v98 = vrcp.pop %v95
    %v99 = vmul.f32 %v19, %v98
    %100 = vst.msk [vmem:[#allocation2] sm:$0x3] %vm13, %v99
    // Predicated region
    $region10: #{simnorm.1} parent=1 // pred_check
      _
    $region11: #{simnorm.1} parent=1 // pred_check_branch
      %102 = sbr.rel (0) target = $region13
    $region12: #{simnorm.1} parent=1 // pred_region
      %s104 = ssub.s32 32, 32
      %105 = vsyncadd [#allocation3], %s104
      %s107 = sshll.u32 [#allocation2], 4
      %s108 = int_to_ptr.vmem [resolvable:$true] %s107
      %110 = dma.vmem_to_hbm [thread:$0]  %s108, 32, %s2, [#allocation3]
    $region13: #{simnorm.1} parent=1 // pred_fallthru
      _
    // Predicated region
    $region14: #{simnorm.1} parent=1 // pred_check
      _
    $region15: #{simnorm.1} parent=1 // pred_check_branch
      %112 = sbr.rel (0) target = $region17
    $region16: #{simnorm.1} parent=1 // pred_region
      %113 = dma.done [#allocation3], 32
    $region17: #{simnorm.1} parent=1 // pred_fallthru
      _
    %114 = vsyncpa [#allocation3], 1

</llo_original>
